<compile_context>
chip_gen: v7x
topology: tpu7x:2x2x1
jax: 0.10.0
libtpu: 0.0.40
codegen_flags: <defaults>
</compile_context>

<pallas_src>
import functools

import numpy as np
import jax
import jax.numpy as jnp
from jax import lax
from jax.experimental import pallas as pl
from jax.experimental.pallas import tpu as pltpu


def _round_up(v, m):
    return (v + m - 1) // m * m


def hexblock_kernel(x_ref, w_ref, b_ref, o_ref, acts_ref, *,
                    cin, cp, wp, npd, batch):
    """One grid step processes `batch` images.

    x_ref   : (batch, cin, pin_pad)  flat zero-padded images
    w_ref   : (cout, 7*cp)           tap weights in 8-aligned column blocks (zero-padded)
    b_ref   : (cout, 1)              f32 bias
    o_ref   : (batch, cout, npd)     flat outputs (junk tail lanes sliced off by wrapper)
    acts_ref: (7*cp, batch*npd)      VMEM scratch; tap slabs at 8-aligned row offsets
    """
    start = wp + 1                                      # flat index of output (0, 0)

    # Padding rows of each tap slab multiply zero weight columns; clear them so stale
    # VMEM (possibly NaN) can never leak through 0*NaN.  Free when cin % 8 == 0.
    if cp != cin:
        zeros_pad = jnp.zeros((cp - cin, batch * npd), acts_ref.dtype)
        for t in range(7):
            acts_ref[t * cp + cin:(t + 1) * cp, :] = zeros_pad

    # Column parity of each flat output position (identical for every image in the chunk);
    # broadcast ONCE to the tap shape so the four selects below don't re-broadcast
    # (JAX does not CSE broadcast_in_dim).
    col = lax.broadcasted_iota(jnp.int32, (1, npd), 1)
    even = jnp.broadcast_to((col % wp) % 2 == 0, (cin, npd))

    for b in range(batch):                              # static unroll over chunk images
        xf = x_ref[b]                                   # (cin, pin_pad), native dtype

        def tap(off):                                   # static lane-shifted slice
            s0 = start + off
            return xf[:, s0:s0 + npd]                   # (cin, npd)

        # 9 distinct shifted slices, each materialized exactly once.
        up, center, down = tap(-wp), tap(0), tap(wp)
        nw, west, ne = tap(-wp - 1), tap(-1), tap(-wp + 1)
        east, sw, se = tap(1), tap(wp - 1), tap(wp + 1)

        ul = jnp.where(even, nw, west)                  # k1[0,0] upper-left
        ll = jnp.where(even, west, sw)                  # k1[1,0] lower-left
        ur = jnp.where(even, ne, east)                  # k1[0,1] upper-right
        lr = jnp.where(even, east, se)                  # k1[1,1] lower-right

        lo = b * npd                                    # 128-aligned lane offset
        for t, v in enumerate((up, center, down, ul, ll, ur, lr)):
            acts_ref[t * cp:t * cp + cin, lo:lo + npd] = v

    # ONE fused MXU matmul over the whole chunk (conv + residual folded into weights),
    # f32 accumulation; f32 bias added post-dot, then ReLU.
    acc = jnp.dot(w_ref[...], acts_ref[...], preferred_element_type=jnp.float32)
    acc = jnp.maximum(acc + b_ref[...], 0.0).astype(o_ref.dtype)

    for b in range(batch):                              # lane-dense (cout, npd) stores
        o_ref[b] = acc[:, b * npd:(b + 1) * npd]


def hex_block(x_nchw, k0, k1, bias, residual=True, batch_chunk=None):
    """HexBlock forward.  x_nchw: (N, Cin, H, W);  k0: (Cout, Cin, 3, 1);
    k1: (Cout, Cin, 2, 2);  bias: (Cout,).  Returns (N, Cout, H, W)."""
    N, Cin, H, W = x_nchw.shape
    Cout = k0.shape[0]
    if residual:
        assert Cin == Cout, "residual add requires in_channels == out_channels"

    wp = W + 2                                     # padded row stride
    n_out = H * wp                                 # valid flat output positions per image
    npd = _round_up(n_out, 128)                    # lane-padded output width (dense stores)
    pin = (H + 3) * wp                             # flat padded image length
    pin_pad = _round_up(max(pin, npd + 2 * wp + 2), 128)   # covers the widest tap shift
    cp = _round_up(Cin, 8)                         # 8-sublane-aligned rows per tap slab
    kdim = 7 * cp

    # Chunk the batch so each dot / store sees >= 512 lanes (amortizes per-step overhead).
    if batch_chunk is None:
        batch_chunk = N
        for d in range(1, N + 1):
            if N % d == 0 and d * npd >= 512:
                batch_chunk = d
                break
    assert N % batch_chunk == 0
    B = batch_chunk

    # --- input: one cheap zero-pad + free reshape + flat tail pad (NO transposes) ---
    xf = jnp.pad(x_nchw, ((0, 0), (0, 0), (1, 2), (1, 1))).reshape(N, Cin, pin)
    xf = jnp.pad(xf, ((0, 0), (0, 0), (0, pin_pad - pin)))

    # --- weights: 7 hex taps packed into 8-aligned, zero-padded column blocks; residual
    #     identity folded into the centre tap.  Bias stays f32 and is added post-dot. ---
    w_center = k0[:, :, 1, 0]
    if residual:
        w_center = w_center + jnp.eye(Cout, Cin, dtype=w_center.dtype)
    blocks = [k0[:, :, 0, 0], w_center, k0[:, :, 2, 0],
              k1[:, :, 0, 0], k1[:, :, 1, 0], k1[:, :, 0, 1], k1[:, :, 1, 1]]
    w_aug = jnp.concatenate(
        [jnp.pad(blk, ((0, 0), (0, cp - Cin))) for blk in blocks],
        axis=1).astype(x_nchw.dtype)                               # (Cout, 7*cp)
    b_col = bias.astype(jnp.float32).reshape(Cout, 1)

    out_flat = pl.pallas_call(
        functools.partial(hexblock_kernel, cin=Cin, cp=cp, wp=wp, npd=npd, batch=B),
        out_shape=jax.ShapeDtypeStruct((N, Cout, npd), x_nchw.dtype),
        grid=(N // B,),
        in_specs=[
            pl.BlockSpec((B, Cin, pin_pad), lambda n: (n, 0, 0)),
            pl.BlockSpec((Cout, kdim), lambda n: (0, 0)),
            pl.BlockSpec((Cout, 1), lambda n: (0, 0)),
        ],
        out_specs=pl.BlockSpec((B, Cout, npd), lambda n: (n, 0, 0)),
        scratch_shapes=[pltpu.VMEM((kdim, B * npd), x_nchw.dtype)],
        compiler_params=pltpu.CompilerParams(
            dimension_semantics=("parallel",),        # batch chunks split across TCs
            vmem_limit_bytes=48 * 1024 * 1024),       # headroom under v7x's 64 MiB VMEM
    )(xf, w_aug, b_col)
    # TODO(synk): for production Cin/H/W, add an inner "arbitrary" grid axis over H-row
    #             tiles (1-row halo) so double-buffered tiles fit v7x's 64 MiB VMEM and each
    #             TensorCore still gets a multi-step pipeline even at small N.

    # flat position p = r*(W+2) + c -> (r, c); drop the lane padding and the 2 pad columns.
    return out_flat[:, :, :n_out].reshape(N, Cout, H, wp)[:, :, :, :W]


def hex_block_ref(x_nchw, k0, k1, bias, residual=True):
    """Pure-JAX reference with identical semantics (for verification)."""
    N, Cin, H, W = x_nchw.shape
    Cout = k0.shape[0]
    x = jnp.transpose(x_nchw, (0, 2, 3, 1))
    xp = jnp.pad(x, ((0, 0), (1, 1), (1, 1), (0, 0)))

    def tap(dr, dc):
        return xp[:, 1 + dr:1 + dr + H, 1 + dc:1 + dc + W, :]

    even = (jnp.arange(W).reshape(1, 1, W, 1) % 2) == 0
    ws = [k0[:, :, 0, 0], k0[:, :, 1, 0], k0[:, :, 2, 0],
          k1[:, :, 0, 0], k1[:, :, 1, 0], k1[:, :, 0, 1], k1[:, :, 1, 1]]
    taps = [tap(-1, 0), tap(0, 0), tap(1, 0),
            jnp.where(even, tap(-1, -1), tap(0, -1)),
            jnp.where(even, tap(0, -1), tap(1, -1)),
            jnp.where(even, tap(-1, 1), tap(0, 1)),
            jnp.where(even, tap(0, 1), tap(1, 1))]
    out = bias.reshape(1, 1, 1, Cout).astype(jnp.float32)
    for wi, xi in zip(ws, taps):
        out = out + jnp.einsum('nhwi,oi->nhwo', xi, wi)
    if residual:
        out = out + x
    out = jnp.maximum(out, 0.0)
    return jnp.transpose(out, (0, 3, 1, 2)).astype(x_nchw.dtype)


if __name__ == "__main__":
    # HexBlock(in_channels=4, out_channels=4, residual=True)
    N, C, H, W = 2, 4, 16, 16
    key = jax.random.PRNGKey(0)
    kx, kk0, kk1, kb = jax.random.split(key, 4)
    x = jax.random.normal(kx, (N, C, H, W), jnp.float32)
    k0 = 0.1 * jax.random.normal(kk0, (C, C, 3, 1), jnp.float32)   # same-column taps
    k1 = 0.1 * jax.random.normal(kk1, (C, C, 2, 2), jnp.float32)   # adjacent-column taps
    bias = 0.1 * jax.random.normal(kb, (C,), jnp.float32)

    out = hex_block(x, k0, k1, bias, residual=True)
    out = jax.block_until_ready(out)
    assert out.shape == (N, C, H, W)

    ref = hex_block_ref(x, k0, k1, bias, residual=True)
    # residual folded into the matmul -> tiny accumulation-order differences
    np.testing.assert_allclose(np.asarray(out), np.asarray(ref), rtol=1e-4, atol=1e-4)

    print("KERNEL_OK")
</pallas_src>

<mosaic_0001>
module attributes {stable_mosaic.version = 11 : i64} {
  func.func @hexblock_kernel(%arg0: i32, %arg1: memref<2x4x512xf32, #tpu.memory_space<vmem>>, %arg2: memref<4x56xf32, #tpu.memory_space<vmem>>, %arg3: memref<4x1xf32, #tpu.memory_space<vmem>>, %arg4: memref<2x4x384xf32, #tpu.memory_space<vmem>>, %arg5: memref<56x768xf32, #tpu.memory_space<vmem>>) attributes {dimension_semantics = [#tpu.dimension_semantics<parallel>], iteration_bounds = array<i64: 1>, scalar_prefetch = 0 : i64, scratch_operands = 1 : i64, tpu.core_type = #tpu.core_type<tc>, window_params = [{transform_indices = @transform_0, window_bounds = array<i64: 2, 4, 512>}, {pipeline_mode = #tpu.pipeline_mode<synchronous>, transform_indices = @transform_1, window_bounds = array<i64: 4, 56>}, {pipeline_mode = #tpu.pipeline_mode<synchronous>, transform_indices = @transform_2, window_bounds = array<i64: 4, 1>}, {transform_indices = @transform_3, window_bounds = array<i64: 2, 4, 384>}]} {
    %cst = arith.constant 0.000000e+00 : f32
    %0 = vector.broadcast %cst : f32 to vector<4x768xf32>
    %c4 = arith.constant 4 : index
    %c0 = arith.constant 0 : index
    %1 = vector.load %arg5[%c4, %c0] : memref<56x768xf32, #tpu.memory_space<vmem>>, vector<4x768xf32>
    tpu.vector_store %arg5[%c4, %c0], %0 {strides = array<i32>} : memref<56x768xf32, #tpu.memory_space<vmem>>, vector<4x768xf32>,
    %c12 = arith.constant 12 : index
    %c0_0 = arith.constant 0 : index
    %2 = vector.load %arg5[%c12, %c0_0] : memref<56x768xf32, #tpu.memory_space<vmem>>, vector<4x768xf32>
    tpu.vector_store %arg5[%c12, %c0_0], %0 {strides = array<i32>} : memref<56x768xf32, #tpu.memory_space<vmem>>, vector<4x768xf32>,
    %c20 = arith.constant 20 : index
    %c0_1 = arith.constant 0 : index
    %3 = vector.load %arg5[%c20, %c0_1] : memref<56x768xf32, #tpu.memory_space<vmem>>, vector<4x768xf32>
    tpu.vector_store %arg5[%c20, %c0_1], %0 {strides = array<i32>} : memref<56x768xf32, #tpu.memory_space<vmem>>, vector<4x768xf32>,
    %c28 = arith.constant 28 : index
    %c0_2 = arith.constant 0 : index
    %4 = vector.load %arg5[%c28, %c0_2] : memref<56x768xf32, #tpu.memory_space<vmem>>, vector<4x768xf32>
    tpu.vector_store %arg5[%c28, %c0_2], %0 {strides = array<i32>} : memref<56x768xf32, #tpu.memory_space<vmem>>, vector<4x768xf32>,
    %c36 = arith.constant 36 : index
    %c0_3 = arith.constant 0 : index
    %5 = vector.load %arg5[%c36, %c0_3] : memref<56x768xf32, #tpu.memory_space<vmem>>, vector<4x768xf32>
    tpu.vector_store %arg5[%c36, %c0_3], %0 {strides = array<i32>} : memref<56x768xf32, #tpu.memory_space<vmem>>, vector<4x768xf32>,
    %c44 = arith.constant 44 : index
    %c0_4 = arith.constant 0 : index
    %6 = vector.load %arg5[%c44, %c0_4] : memref<56x768xf32, #tpu.memory_space<vmem>>, vector<4x768xf32>
    tpu.vector_store %arg5[%c44, %c0_4], %0 {strides = array<i32>} : memref<56x768xf32, #tpu.memory_space<vmem>>, vector<4x768xf32>,
    %c52 = arith.constant 52 : index
    %c0_5 = arith.constant 0 : index
    %7 = vector.load %arg5[%c52, %c0_5] : memref<56x768xf32, #tpu.memory_space<vmem>>, vector<4x768xf32>
    tpu.vector_store %arg5[%c52, %c0_5], %0 {strides = array<i32>} : memref<56x768xf32, #tpu.memory_space<vmem>>, vector<4x768xf32>,
    %8 = tpu.iota {dimensions = array<i32: 1>} : vector<1x384xi32>
    %c18_i32 = arith.constant 18 : i32
    %c0_i32 = arith.constant 0 : i32
    %9 = arith.cmpi eq, %c18_i32, %c0_i32 : i32
    %c1_i32 = arith.constant 1 : i32
    %10 = arith.select %9, %c1_i32, %c18_i32 : i32
    %11 = vector.broadcast %10 : i32 to vector<1x384xi32>
    %12 = arith.remsi %8, %11 : vector<1x384xi32>
    %c0_i32_6 = arith.constant 0 : i32
    %13 = vector.broadcast %c0_i32_6 : i32 to vector<1x384xi32>
    %14 = arith.cmpi ne, %12, %13 : vector<1x384xi32>
    %c0_i32_7 = arith.constant 0 : i32
    %15 = vector.broadcast %c0_i32_7 : i32 to vector<1x384xi32>
    %16 = arith.cmpi slt, %12, %15 : vector<1x384xi32>
    %c0_i32_8 = arith.constant 0 : i32
    %17 = arith.cmpi slt, %10, %c0_i32_8 : i32
    %18 = vector.broadcast %17 : i1 to vector<1x384xi1>
    %19 = vector.broadcast %18 : vector<1x384xi1> to vector<1x384xi1>
    %20 = arith.xori %16, %19 : vector<1x384xi1>
    %21 = arith.andi %20, %14 : vector<1x384xi1>
    %22 = vector.broadcast %10 : i32 to vector<1x384xi32>
    %23 = arith.addi %12, %22 : vector<1x384xi32>
    %24 = arith.select %21, %23, %12 : vector<1x384xi1>, vector<1x384xi32>
    %c2_i32 = arith.constant 2 : i32
    %c0_i32_9 = arith.constant 0 : i32
    %25 = arith.cmpi eq, %c2_i32, %c0_i32_9 : i32
    %c1_i32_10 = arith.constant 1 : i32
    %26 = arith.select %25, %c1_i32_10, %c2_i32 : i32
    %27 = vector.broadcast %26 : i32 to vector<1x384xi32>
    %28 = arith.remsi %24, %27 : vector<1x384xi32>
    %c0_i32_11 = arith.constant 0 : i32
    %29 = vector.broadcast %c0_i32_11 : i32 to vector<1x384xi32>
    %30 = arith.cmpi ne, %28, %29 : vector<1x384xi32>
    %c0_i32_12 = arith.constant 0 : i32
    %31 = vector.broadcast %c0_i32_12 : i32 to vector<1x384xi32>
    %32 = arith.cmpi slt, %28, %31 : vector<1x384xi32>
    %c0_i32_13 = arith.constant 0 : i32
    %33 = arith.cmpi slt, %26, %c0_i32_13 : i32
    %34 = vector.broadcast %33 : i1 to vector<1x384xi1>
    %35 = vector.broadcast %34 : vector<1x384xi1> to vector<1x384xi1>
    %36 = arith.xori %32, %35 : vector<1x384xi1>
    %37 = arith.andi %36, %30 : vector<1x384xi1>
    %38 = vector.broadcast %26 : i32 to vector<1x384xi32>
    %39 = arith.addi %28, %38 : vector<1x384xi32>
    %40 = arith.select %37, %39, %28 : vector<1x384xi1>, vector<1x384xi32>
    %c0_i32_14 = arith.constant 0 : i32
    %41 = vector.broadcast %c0_i32_14 : i32 to vector<1x384xi32>
    %42 = arith.cmpi eq, %40, %41 : vector<1x384xi32>
    %43 = vector.shape_cast %42 : vector<1x384xi1> to vector<1x384xi1>
    %44 = vector.broadcast %43 : vector<1x384xi1> to vector<4x384xi1>
    %c0_15 = arith.constant 0 : index
    %c0_16 = arith.constant 0 : index
    %c0_17 = arith.constant 0 : index
    %45 = vector.load %arg1[%c0_15, %c0_16, %c0_17] : memref<2x4x512xf32, #tpu.memory_space<vmem>>, vector<1x4x512xf32>
    %46 = vector.shape_cast %45 : vector<1x4x512xf32> to vector<4x512xf32>
    %47 = vector.extract_strided_slice %46 {offsets = [0, 1], sizes = [4, 384], strides = [1, 1]} : vector<4x512xf32> to vector<4x384xf32>
    %48 = vector.extract_strided_slice %46 {offsets = [0, 19], sizes = [4, 384], strides = [1, 1]} : vector<4x512xf32> to vector<4x384xf32>
    %49 = vector.extract_strided_slice %46 {offsets = [0, 37], sizes = [4, 384], strides = [1, 1]} : vector<4x512xf32> to vector<4x384xf32>
    %50 = vector.extract_strided_slice %46 {offsets = [0, 0], sizes = [4, 384], strides = [1, 1]} : vector<4x512xf32> to vector<4x384xf32>
    %51 = vector.extract_strided_slice %46 {offsets = [0, 18], sizes = [4, 384], strides = [1, 1]} : vector<4x512xf32> to vector<4x384xf32>
    %52 = vector.extract_strided_slice %46 {offsets = [0, 2], sizes = [4, 384], strides = [1, 1]} : vector<4x512xf32> to vector<4x384xf32>
    %53 = vector.extract_strided_slice %46 {offsets = [0, 20], sizes = [4, 384], strides = [1, 1]} : vector<4x512xf32> to vector<4x384xf32>
    %54 = vector.extract_strided_slice %46 {offsets = [0, 36], sizes = [4, 384], strides = [1, 1]} : vector<4x512xf32> to vector<4x384xf32>
    %55 = vector.extract_strided_slice %46 {offsets = [0, 38], sizes = [4, 384], strides = [1, 1]} : vector<4x512xf32> to vector<4x384xf32>
    %56 = arith.select %44, %50, %51 : vector<4x384xi1>, vector<4x384xf32>
    %57 = arith.select %44, %51, %54 : vector<4x384xi1>, vector<4x384xf32>
    %58 = arith.select %44, %52, %53 : vector<4x384xi1>, vector<4x384xf32>
    %59 = arith.select %44, %53, %55 : vector<4x384xi1>, vector<4x384xf32>
    %c0_18 = arith.constant 0 : index
    %c0_19 = arith.constant 0 : index
    %60 = vector.load %arg5[%c0_18, %c0_19] : memref<56x768xf32, #tpu.memory_space<vmem>>, vector<4x384xf32>
    tpu.vector_store %arg5[%c0_18, %c0_19], %47 {strides = array<i32>} : memref<56x768xf32, #tpu.memory_space<vmem>>, vector<4x384xf32>,
    %c8 = arith.constant 8 : index
    %c0_20 = arith.constant 0 : index
    %61 = vector.load %arg5[%c8, %c0_20] : memref<56x768xf32, #tpu.memory_space<vmem>>, vector<4x384xf32>
    tpu.vector_store %arg5[%c8, %c0_20], %48 {strides = array<i32>} : memref<56x768xf32, #tpu.memory_space<vmem>>, vector<4x384xf32>,
    %c16 = arith.constant 16 : index
    %c0_21 = arith.constant 0 : index
    %62 = vector.load %arg5[%c16, %c0_21] : memref<56x768xf32, #tpu.memory_space<vmem>>, vector<4x384xf32>
    tpu.vector_store %arg5[%c16, %c0_21], %49 {strides = array<i32>} : memref<56x768xf32, #tpu.memory_space<vmem>>, vector<4x384xf32>,
    %c24 = arith.constant 24 : index
    %c0_22 = arith.constant 0 : index
    %63 = vector.load %arg5[%c24, %c0_22] : memref<56x768xf32, #tpu.memory_space<vmem>>, vector<4x384xf32>
    tpu.vector_store %arg5[%c24, %c0_22], %56 {strides = array<i32>} : memref<56x768xf32, #tpu.memory_space<vmem>>, vector<4x384xf32>,
    %c32 = arith.constant 32 : index
    %c0_23 = arith.constant 0 : index
    %64 = vector.load %arg5[%c32, %c0_23] : memref<56x768xf32, #tpu.memory_space<vmem>>, vector<4x384xf32>
    tpu.vector_store %arg5[%c32, %c0_23], %57 {strides = array<i32>} : memref<56x768xf32, #tpu.memory_space<vmem>>, vector<4x384xf32>,
    %c40 = arith.constant 40 : index
    %c0_24 = arith.constant 0 : index
    %65 = vector.load %arg5[%c40, %c0_24] : memref<56x768xf32, #tpu.memory_space<vmem>>, vector<4x384xf32>
    tpu.vector_store %arg5[%c40, %c0_24], %58 {strides = array<i32>} : memref<56x768xf32, #tpu.memory_space<vmem>>, vector<4x384xf32>,
    %c48 = arith.constant 48 : index
    %c0_25 = arith.constant 0 : index
    %66 = vector.load %arg5[%c48, %c0_25] : memref<56x768xf32, #tpu.memory_space<vmem>>, vector<4x384xf32>
    tpu.vector_store %arg5[%c48, %c0_25], %59 {strides = array<i32>} : memref<56x768xf32, #tpu.memory_space<vmem>>, vector<4x384xf32>,
    %c1 = arith.constant 1 : index
    %c0_26 = arith.constant 0 : index
    %c0_27 = arith.constant 0 : index
    %67 = vector.load %arg1[%c1, %c0_26, %c0_27] : memref<2x4x512xf32, #tpu.memory_space<vmem>>, vector<1x4x512xf32>
    %68 = vector.shape_cast %67 : vector<1x4x512xf32> to vector<4x512xf32>
    %69 = vector.extract_strided_slice %68 {offsets = [0, 1], sizes = [4, 384], strides = [1, 1]} : vector<4x512xf32> to vector<4x384xf32>
    %70 = vector.extract_strided_slice %68 {offsets = [0, 19], sizes = [4, 384], strides = [1, 1]} : vector<4x512xf32> to vector<4x384xf32>
    %71 = vector.extract_strided_slice %68 {offsets = [0, 37], sizes = [4, 384], strides = [1, 1]} : vector<4x512xf32> to vector<4x384xf32>
    %72 = vector.extract_strided_slice %68 {offsets = [0, 0], sizes = [4, 384], strides = [1, 1]} : vector<4x512xf32> to vector<4x384xf32>
    %73 = vector.extract_strided_slice %68 {offsets = [0, 18], sizes = [4, 384], strides = [1, 1]} : vector<4x512xf32> to vector<4x384xf32>
    %74 = vector.extract_strided_slice %68 {offsets = [0, 2], sizes = [4, 384], strides = [1, 1]} : vector<4x512xf32> to vector<4x384xf32>
    %75 = vector.extract_strided_slice %68 {offsets = [0, 20], sizes = [4, 384], strides = [1, 1]} : vector<4x512xf32> to vector<4x384xf32>
    %76 = vector.extract_strided_slice %68 {offsets = [0, 36], sizes = [4, 384], strides = [1, 1]} : vector<4x512xf32> to vector<4x384xf32>
    %77 = vector.extract_strided_slice %68 {offsets = [0, 38], sizes = [4, 384], strides = [1, 1]} : vector<4x512xf32> to vector<4x384xf32>
    %78 = arith.select %44, %72, %73 : vector<4x384xi1>, vector<4x384xf32>
    %79 = arith.select %44, %73, %76 : vector<4x384xi1>, vector<4x384xf32>
    %80 = arith.select %44, %74, %75 : vector<4x384xi1>, vector<4x384xf32>
    %81 = arith.select %44, %75, %77 : vector<4x384xi1>, vector<4x384xf32>
    %c0_28 = arith.constant 0 : index
    %c384 = arith.constant 384 : index
    %82 = vector.load %arg5[%c0_28, %c384] : memref<56x768xf32, #tpu.memory_space<vmem>>, vector<4x384xf32>
    tpu.vector_store %arg5[%c0_28, %c384], %69 {strides = array<i32>} : memref<56x768xf32, #tpu.memory_space<vmem>>, vector<4x384xf32>,
    %c8_29 = arith.constant 8 : index
    %c384_30 = arith.constant 384 : index
    %83 = vector.load %arg5[%c8_29, %c384_30] : memref<56x768xf32, #tpu.memory_space<vmem>>, vector<4x384xf32>
    tpu.vector_store %arg5[%c8_29, %c384_30], %70 {strides = array<i32>} : memref<56x768xf32, #tpu.memory_space<vmem>>, vector<4x384xf32>,
    %c16_31 = arith.constant 16 : index
    %c384_32 = arith.constant 384 : index
    %84 = vector.load %arg5[%c16_31, %c384_32] : memref<56x768xf32, #tpu.memory_space<vmem>>, vector<4x384xf32>
    tpu.vector_store %arg5[%c16_31, %c384_32], %71 {strides = array<i32>} : memref<56x768xf32, #tpu.memory_space<vmem>>, vector<4x384xf32>,
    %c24_33 = arith.constant 24 : index
    %c384_34 = arith.constant 384 : index
    %85 = vector.load %arg5[%c24_33, %c384_34] : memref<56x768xf32, #tpu.memory_space<vmem>>, vector<4x384xf32>
    tpu.vector_store %arg5[%c24_33, %c384_34], %78 {strides = array<i32>} : memref<56x768xf32, #tpu.memory_space<vmem>>, vector<4x384xf32>,
    %c32_35 = arith.constant 32 : index
    %c384_36 = arith.constant 384 : index
    %86 = vector.load %arg5[%c32_35, %c384_36] : memref<56x768xf32, #tpu.memory_space<vmem>>, vector<4x384xf32>
    tpu.vector_store %arg5[%c32_35, %c384_36], %79 {strides = array<i32>} : memref<56x768xf32, #tpu.memory_space<vmem>>, vector<4x384xf32>,
    %c40_37 = arith.constant 40 : index
    %c384_38 = arith.constant 384 : index
    %87 = vector.load %arg5[%c40_37, %c384_38] : memref<56x768xf32, #tpu.memory_space<vmem>>, vector<4x384xf32>
    tpu.vector_store %arg5[%c40_37, %c384_38], %80 {strides = array<i32>} : memref<56x768xf32, #tpu.memory_space<vmem>>, vector<4x384xf32>,
    %c48_39 = arith.constant 48 : index
    %c384_40 = arith.constant 384 : index
    %88 = vector.load %arg5[%c48_39, %c384_40] : memref<56x768xf32, #tpu.memory_space<vmem>>, vector<4x384xf32>
    tpu.vector_store %arg5[%c48_39, %c384_40], %81 {strides = array<i32>} : memref<56x768xf32, #tpu.memory_space<vmem>>, vector<4x384xf32>,
    %c0_41 = arith.constant 0 : index
    %c0_42 = arith.constant 0 : index
    %89 = vector.load %arg2[%c0_41, %c0_42] : memref<4x56xf32, #tpu.memory_space<vmem>>, vector<4x56xf32>
    %c0_43 = arith.constant 0 : index
    %c0_44 = arith.constant 0 : index
    %90 = vector.load %arg5[%c0_43, %c0_44] : memref<56x768xf32, #tpu.memory_space<vmem>>, vector<56x768xf32>
    %cst_45 = arith.constant dense<0.000000e+00> : vector<4x768xf32>
    %91 = tpu.matmul %89, %90, %cst_45 {dimension_numbers = #tpu.dot_dimension_numbers<[1], [0], [0], [1], [0, 0, 1, 1], [], []>} : vector<4x56xf32>, vector<56x768xf32>, vector<4x768xf32> -> vector<4x768xf32>
    %c0_46 = arith.constant 0 : index
    %c0_47 = arith.constant 0 : index
    %92 = vector.load %arg3[%c0_46, %c0_47] : memref<4x1xf32, #tpu.memory_space<vmem>>, vector<4x1xf32>
    %93 = vector.broadcast %92 : vector<4x1xf32> to vector<4x768xf32>
    %94 = arith.addf %91, %93 : vector<4x768xf32>
    %cst_48 = arith.constant 0.000000e+00 : f32
    %95 = vector.broadcast %cst_48 : f32 to vector<4x768xf32>
    %96 = arith.maximumf %94, %95 : vector<4x768xf32>
    %97 = vector.extract_strided_slice %96 {offsets = [0, 0], sizes = [4, 384], strides = [1, 1]} : vector<4x768xf32> to vector<4x384xf32>
    %c0_49 = arith.constant 0 : index
    %c0_50 = arith.constant 0 : index
    %c0_51 = arith.constant 0 : index
    %98 = vector.load %arg4[%c0_49, %c0_50, %c0_51] : memref<2x4x384xf32, #tpu.memory_space<vmem>>, vector<1x4x384xf32>
    %99 = vector.shape_cast %98 : vector<1x4x384xf32> to vector<4x384xf32>
    %100 = vector.shape_cast %97 : vector<4x384xf32> to vector<1x4x384xf32>
    tpu.vector_store %arg4[%c0_49, %c0_50, %c0_51], %100 {strides = array<i32>} : memref<2x4x384xf32, #tpu.memory_space<vmem>>, vector<1x4x384xf32>,
    %101 = vector.extract_strided_slice %96 {offsets = [0, 384], sizes = [4, 384], strides = [1, 1]} : vector<4x768xf32> to vector<4x384xf32>
    %c1_52 = arith.constant 1 : index
    %c0_53 = arith.constant 0 : index
    %c0_54 = arith.constant 0 : index
    %102 = vector.load %arg4[%c1_52, %c0_53, %c0_54] : memref<2x4x384xf32, #tpu.memory_space<vmem>>, vector<1x4x384xf32>
    %103 = vector.shape_cast %102 : vector<1x4x384xf32> to vector<4x384xf32>
    %104 = vector.shape_cast %101 : vector<4x384xf32> to vector<1x4x384xf32>
    tpu.vector_store %arg4[%c1_52, %c0_53, %c0_54], %104 {strides = array<i32>} : memref<2x4x384xf32, #tpu.memory_space<vmem>>, vector<1x4x384xf32>,
    return
  }
  func.func @transform_0(%arg0: i32) -> (i32, i32, i32) {
    %c0_i32 = arith.constant 0 : i32
    %c0_i32_0 = arith.constant 0 : i32
    %c0_i32_1 = arith.constant 0 : i32
    return %arg0, %c0_i32, %c0_i32_0 : i32, i32, i32
  }
  func.func @transform_1(%arg0: i32) -> (i32, i32) {
    %c0_i32 = arith.constant 0 : i32
    %c0_i32_0 = arith.constant 0 : i32
    %c0_i32_1 = arith.constant 0 : i32
    return %c0_i32, %c0_i32_0 : i32, i32
  }
  func.func @transform_2(%arg0: i32) -> (i32, i32) {
    %c0_i32 = arith.constant 0 : i32
    %c0_i32_0 = arith.constant 0 : i32
    %c0_i32_1 = arith.constant 0 : i32
    return %c0_i32, %c0_i32_0 : i32, i32
  }
  func.func @transform_3(%arg0: i32) -> (i32, i32, i32) {
    %c0_i32 = arith.constant 0 : i32
    %c0_i32_0 = arith.constant 0 : i32
    %c0_i32_1 = arith.constant 0 : i32
    return %arg0, %c0_i32, %c0_i32_0 : i32, i32, i32
  }
}

</mosaic_0001>

<llo_original>
// kernel: tpu_custom_call.1
$region0: #{tpu_custom_call.1}
  #allocation0 [shape = 'u32[]', space=smem, size = 0x4, offset = 0x4, fixed_abs, tag = 'smem constant byte address 0x4 - core index']
  #allocation1 [shape = 'u32[144,128]{1,0:T(1,128)}', space=vmem, size = 0x12000, scoped, tag = 'internal scratch']
  #allocation2 [shape = 'f32[56,768]{1,0:T(8,128)}', space=vmem, size = 0x2a000, scoped, tag = 'scratch operand']
  %s0 = inlined_call_operand.hbm [shape: f32[2,4,512], index: 0, kind: input, shape index: {}]
  %s1 = inlined_call_operand.vmem [shape: f32[4,56], index: 1, kind: input, shape index: {}]
  %s2 = inlined_call_operand.vmem [shape: f32[4,1], index: 2, kind: input, shape index: {}]
  %s3 = inlined_call_operand.hbm [shape: f32[2,4,384], index: 3, kind: output, shape index: {}]
  %s4 = sld [smem:[#allocation0]]
  $region26: #{tpu_custom_call.1} parent=0
    _
  %s6 = ssub.s32 1, %s4
  %s7 = scalar_select 0, %s6, %s4
  $region1: #{tpu_custom_call.1} parent=0
    #allocation3 [shape = 'u8[16384]{0}', space=vmem, size = 0x4000, scoped, tag = 'input window, operand 0, single buffered']
    #allocation4 [shape = 's32[1]{0}', space=sflag, size = 0x4, scoped, tag = 'scoped memory for tpu_custom_call.1']
    #allocation5 [shape = 's32[1]{0}', space=sflag, size = 0x4, scoped, tag = 'scoped memory for tpu_custom_call.1']
    #allocation6 [shape = 'u8[12288]{0}', space=vmem, size = 0x3000, scoped, tag = 'output window, operand 0, single buffered']
    %8 = vsyncpa [#allocation4], 0
    %9 = vsyncpa [#allocation5], 0
    // Predicated region
    $region2: #{tpu_custom_call.1} parent=1 // pred_check
      _
    $region3: #{tpu_custom_call.1} parent=1 // pred_check_branch
      %11 = sbr.rel (0) target = $region5
    $region4: #{tpu_custom_call.1} parent=1 // pred_region
      %s13 = ssub.s32 512, 512
      %14 = vsyncadd [#allocation4], %s13
      %s15 = sshll.u32 [#allocation3], 4
      %s16 = int_to_ptr.vmem [resolvable:$true] %s15
      %21 = dma.hbm_to_vmem [thread:$0]  %s0, 512, %s16, [#allocation4], 256, 256, 16
    $region5: #{tpu_custom_call.1} parent=1 // pred_fallthru
      _
    // Predicated region
    $region6: #{tpu_custom_call.1} parent=1 // pred_check
      _
    $region7: #{tpu_custom_call.1} parent=1 // pred_check_branch
      %23 = sbr.rel (0) target = $region9
    $region8: #{tpu_custom_call.1} parent=1 // pred_region
      _
    $region9: #{tpu_custom_call.1} parent=1 // pred_fallthru
      _
    // Predicated region
    $region10: #{tpu_custom_call.1} parent=1 // pred_check
      _
    $region11: #{tpu_custom_call.1} parent=1 // pred_check_branch
      %25 = sbr.rel (0) target = $region13
    $region12: #{tpu_custom_call.1} parent=1 // pred_region
      _
    $region13: #{tpu_custom_call.1} parent=1 // pred_fallthru
      _
    // Predicated region
    $region14: #{tpu_custom_call.1} parent=1 // pred_check
      _
    $region15: #{tpu_custom_call.1} parent=1 // pred_check_branch
      %27 = sbr.rel (0) target = $region17
    $region16: #{tpu_custom_call.1} parent=1 // pred_region
      %28 = dma.done [#allocation4], 512
    $region17: #{tpu_custom_call.1} parent=1 // pred_fallthru
      _
    %29 = vst [vmem:[#allocation2] sm:$0xf0] 0.0
    %30 = vst [vmem:[#allocation2 + $0x8] sm:$0xf0] 0.0
    %31 = vst [vmem:[#allocation2 + $0x10] sm:$0xf0] 0.0
    %32 = vst [vmem:[#allocation2 + $0x18] sm:$0xf0] 0.0
    %33 = vst [vmem:[#allocation2 + $0x20] sm:$0xf0] 0.0
    %34 = vst [vmem:[#allocation2 + $0x28] sm:$0xf0] 0.0
    %35 = vst [vmem:[#allocation2 + $0x30] sm:$0xf0] 0.0
    %36 = vst [vmem:[#allocation2 + $0x38] sm:$0xf0] 0.0
    %37 = vst [vmem:[#allocation2 + $0x40] sm:$0xf0] 0.0
    %38 = vst [vmem:[#allocation2 + $0x48] sm:$0xf0] 0.0
    %39 = vst [vmem:[#allocation2 + $0x50] sm:$0xf0] 0.0
    %40 = vst [vmem:[#allocation2 + $0x58] sm:$0xf0] 0.0
    %41 = vst [vmem:[#allocation2 + $0x60] sm:$0xf0] 0.0
    %42 = vst [vmem:[#allocation2 + $0x68] sm:$0xf0] 0.0
    %43 = vst [vmem:[#allocation2 + $0x70] sm:$0xf0] 0.0
    %44 = vst [vmem:[#allocation2 + $0x78] sm:$0xf0] 0.0
    %45 = vst [vmem:[#allocation2 + $0x80] sm:$0xf0] 0.0
    %46 = vst [vmem:[#allocation2 + $0x88] sm:$0xf0] 0.0
    %47 = vst [vmem:[#allocation2 + $0x90] sm:$0xf0] 0.0
    %48 = vst [vmem:[#allocation2 + $0x98] sm:$0xf0] 0.0
    %49 = vst [vmem:[#allocation2 + $0xa0] sm:$0xf0] 0.0
    %50 = vst [vmem:[#allocation2 + $0xa8] sm:$0xf0] 0.0
    %51 = vst [vmem:[#allocation2 + $0xb0] sm:$0xf0] 0.0
    %52 = vst [vmem:[#allocation2 + $0xb8] sm:$0xf0] 0.0
    %53 = vst [vmem:[#allocation2 + $0xc0] sm:$0xf0] 0.0
    %54 = vst [vmem:[#allocation2 + $0xc8] sm:$0xf0] 0.0
    %55 = vst [vmem:[#allocation2 + $0xd0] sm:$0xf0] 0.0
    %56 = vst [vmem:[#allocation2 + $0xd8] sm:$0xf0] 0.0
    %57 = vst [vmem:[#allocation2 + $0xe0] sm:$0xf0] 0.0
    %58 = vst [vmem:[#allocation2 + $0xe8] sm:$0xf0] 0.0
    %59 = vst [vmem:[#allocation2 + $0xf0] sm:$0xf0] 0.0
    %60 = vst [vmem:[#allocation2 + $0xf8] sm:$0xf0] 0.0
    %61 = vst [vmem:[#allocation2 + $0x100] sm:$0xf0] 0.0
    %62 = vst [vmem:[#allocation2 + $0x108] sm:$0xf0] 0.0
    %63 = vst [vmem:[#allocation2 + $0x110] sm:$0xf0] 0.0
    %64 = vst [vmem:[#allocation2 + $0x118] sm:$0xf0] 0.0
    %65 = vst [vmem:[#allocation2 + $0x120] sm:$0xf0] 0.0
    %66 = vst [vmem:[#allocation2 + $0x128] sm:$0xf0] 0.0
    %67 = vst [vmem:[#allocation2 + $0x130] sm:$0xf0] 0.0
    %68 = vst [vmem:[#allocation2 + $0x138] sm:$0xf0] 0.0
    %69 = vst [vmem:[#allocation2 + $0x140] sm:$0xf0] 0.0
    %70 = vst [vmem:[#allocation2 + $0x148] sm:$0xf0] 0.0
    %v71 = vlaneseq
    %v72 = vand.u32 %v71, 127
    %v73 = vadd.s32 %v72, 128
    %v74 = vadd.s32 %v72, 256
    %vm75 = vcmp.lt.s32.totalorder %v72, 0
    %v76 = vsub.s32 0, %v72
    %v77 = vsel %vm75, %v76, %v72
    %v78 = vmul.u32.u64.compose %v77, 3817748708
    %v79 = vextract.low.u32 %v78
    %v80 = vextract.high.u32 %v78
    %v81 = vshrl.u32 %v80, 4
    %v82 = vmul.u32 %v81, 18
    %v83 = vsub.s32 %v77, %v82
    %v84 = vsub.s32 0, %v83
    %v85 = vsel %vm75, %v84, %v83
    %vm86 = vcmp.lt.s32.totalorder %v73, 0
    %v87 = vsub.s32 0, %v73
    %v88 = vsel %vm86, %v87, %v73
    %v89 = vmul.u32.u64.compose %v88, 3817748708
    %v90 = vextract.low.u32 %v89
    %v91 = vextract.high.u32 %v89
    %v92 = vshrl.u32 %v91, 4
    %v93 = vmul.u32 %v92, 18
    %v94 = vsub.s32 %v88, %v93
    %v95 = vsub.s32 0, %v94
    %v96 = vsel %vm86, %v95, %v94
    %vm97 = vcmp.lt.s32.totalorder %v74, 0
    %v98 = vsub.s32 0, %v74
    %v99 = vsel %vm97, %v98, %v74
    %v100 = vmul.u32.u64.compose %v99, 3817748708
    %v101 = vextract.low.u32 %v100
    %v102 = vextract.high.u32 %v100
    %v103 = vshrl.u32 %v102, 4
    %v104 = vmul.u32 %v103, 18
    %v105 = vsub.s32 %v99, %v104
    %v106 = vsub.s32 0, %v105
    %v107 = vsel %vm97, %v106, %v105
    %vm108 = vcmp.ne.s32.totalorder %v85, 0
    %vm109 = vcmp.ne.s32.totalorder %v96, 0
    %vm110 = vcmp.ne.s32.totalorder %v107, 0
    %vm111 = vcmp.lt.s32.totalorder %v85, 0
    %vm112 = vcmp.lt.s32.totalorder %v96, 0
    %vm113 = vcmp.lt.s32.totalorder %v107, 0
    %vm114 = vmand %vm111, %vm108
    %vm115 = vmand %vm112, %vm109
    %vm116 = vmand %vm113, %vm110
    %v117 = vadd.s32 %v85, 18
    %v118 = vadd.s32 %v96, 18
    %v119 = vadd.s32 %v107, 18
    %v120 = vsel %vm114, %v117, %v85
    %v121 = vsel %vm115, %v118, %v96
    %v122 = vsel %vm116, %v119, %v107
    %vm123 = vcmp.lt.s32.totalorder %v120, 0
    %v124 = vsub.s32 0, %v120
    %v125 = vsel %vm123, %v124, %v120
    %v126 = vshrl.u32 %v125, 1
    %v127 = vand.u32 %v125, 1
    %v128 = vsub.s32 0, %v127
    %v129 = vsel %vm123, %v128, %v127
    %vm130 = vcmp.lt.s32.totalorder %v121, 0
    %v131 = vsub.s32 0, %v121
    %v132 = vsel %vm130, %v131, %v121
    %v133 = vshrl.u32 %v132, 1
    %v134 = vand.u32 %v132, 1
    %v135 = vsub.s32 0, %v134
    %v136 = vsel %vm130, %v135, %v134
    %vm137 = vcmp.lt.s32.totalorder %v122, 0
    %v138 = vsub.s32 0, %v122
    %v139 = vsel %vm137, %v138, %v122
    %v140 = vshrl.u32 %v139, 1
    %v141 = vand.u32 %v139, 1
    %v142 = vsub.s32 0, %v141
    %v143 = vsel %vm137, %v142, %v141
    %vm144 = vcmp.ne.s32.totalorder %v129, 0
    %vm145 = vcmp.ne.s32.totalorder %v136, 0
    %vm146 = vcmp.ne.s32.totalorder %v143, 0
    %vm147 = vcmp.lt.s32.totalorder %v129, 0
    %vm148 = vcmp.lt.s32.totalorder %v136, 0
    %vm149 = vcmp.lt.s32.totalorder %v143, 0
    %vm150 = vmand %vm147, %vm144
    %vm151 = vmand %vm148, %vm145
    %vm152 = vmand %vm149, %vm146
    %v153 = vadd.s32 %v129, 2
    %v154 = vadd.s32 %v136, 2
    %v155 = vadd.s32 %v143, 2
    %v156 = vsel %vm150, %v153, %v129
    %v157 = vsel %vm151, %v154, %v136
    %v158 = vsel %vm152, %v155, %v143
    %vm159 = vcmp.eq.s32.totalorder %v156, 0
    %vm160 = vcmp.eq.s32.totalorder %v157, 0
    %vm161 = vcmp.eq.s32.totalorder %v158, 0
    %v162 = vsel %vm159, 1, 0
    %v163 = vsel %vm160, 1, 0
    %v164 = vsel %vm161, 1, 0
    %vm165 = vcmp.eq.s32.totalorder %v162, 1
    %vm166 = vcmp.eq.s32.totalorder %v163, 1
    %vm167 = vcmp.eq.s32.totalorder %v164, 1
    %v168 = vld [vmem:[#allocation3] sm:$0xff]
    %v169 = vld [vmem:[#allocation3 + $0x8] sm:$0xff]
    %v172 = vcombine.high %v168, %v168
    %v174 = vcombine.high %v169, %v169
    %175 = vrot.lane.b32.xlu0 %v168, 110
    %v176 = vpop.permute.xlu0 %175
    %177 = vrot.lane.b32.xlu0 %v172, 110
    %v178 = vpop.permute.xlu0 %177
    %179 = vrot.lane.b32.xlu0 %v169, 110
    %v180 = vpop.permute.xlu0 %179
    %181 = vrot.lane.b32.xlu0 %v174, 110
    %v182 = vpop.permute.xlu0 %181
    %vm183 = vcmask 900096
    %v184 = vsel %vm183, %v176, %v178
    %v185 = vsel %vm183, %v178, %v180
    %v186 = vsel %vm183, %v180, %v182
    %v190 = vsel %vm165, %v168, %v184
    %v191 = vsel %vm166, %v172, %v185
    %v192 = vsel %vm167, %v169, %v186
    %193 = vrot.lane.b32.xlu0 %v168, 92
    %v194 = vpop.permute.xlu0 %193
    %195 = vrot.lane.b32.xlu0 %v172, 92
    %v196 = vpop.permute.xlu0 %195
    %197 = vrot.lane.b32.xlu0 %v169, 92
    %v198 = vpop.permute.xlu0 %197
    %199 = vrot.lane.b32.xlu0 %v174, 92
    %v200 = vpop.permute.xlu0 %199
    %vm201 = vcmask 752640
    %v202 = vsel %vm201, %v194, %v196
    %v203 = vsel %vm201, %v196, %v198
    %v204 = vsel %vm201, %v198, %v200
    %v208 = vsel %vm165, %v184, %v202
    %v209 = vsel %vm166, %v185, %v203
    %v210 = vsel %vm167, %v186, %v204
    %211 = vrot.lane.b32.xlu0 %v168, 126
    %v212 = vpop.permute.xlu0 %211
    %213 = vrot.lane.b32.xlu0 %v172, 126
    %v214 = vpop.permute.xlu0 %213
    %215 = vrot.lane.b32.xlu0 %v169, 126
    %v216 = vpop.permute.xlu0 %215
    %217 = vrot.lane.b32.xlu0 %v174, 126
    %v218 = vpop.permute.xlu0 %217
    %vm219 = vcmask 1031168
    %v220 = vsel %vm219, %v212, %v214
    %v221 = vsel %vm219, %v214, %v216
    %v222 = vsel %vm219, %v216, %v218
    %226 = vrot.lane.b32.xlu0 %v168, 108
    %v227 = vpop.permute.xlu0 %226
    %228 = vrot.lane.b32.xlu0 %v172, 108
    %v229 = vpop.permute.xlu0 %228
    %230 = vrot.lane.b32.xlu0 %v169, 108
    %v231 = vpop.permute.xlu0 %230
    %232 = vrot.lane.b32.xlu0 %v174, 108
    %v233 = vpop.permute.xlu0 %232
    %vm234 = vcmask 883712
    %v235 = vsel %vm234, %v227, %v229
    %v236 = vsel %vm234, %v229, %v231
    %v237 = vsel %vm234, %v231, %v233
    %v241 = vsel %vm165, %v220, %v235
    %v242 = vsel %vm166, %v221, %v236
    %v243 = vsel %vm167, %v222, %v237
    %244 = vrot.lane.b32.xlu0 %v168, 90
    %v245 = vpop.permute.xlu0 %244
    %246 = vrot.lane.b32.xlu0 %v172, 90
    %v247 = vpop.permute.xlu0 %246
    %248 = vrot.lane.b32.xlu0 %v169, 90
    %v249 = vpop.permute.xlu0 %248
    %250 = vrot.lane.b32.xlu0 %v174, 90
    %v251 = vpop.permute.xlu0 %250
    %vm252 = vcmask 736256
    %v253 = vsel %vm252, %v245, %v247
    %v254 = vsel %vm252, %v247, %v249
    %v255 = vsel %vm252, %v249, %v251
    %v259 = vsel %vm165, %v235, %v253
    %v260 = vsel %vm166, %v236, %v254
    %v261 = vsel %vm167, %v237, %v255
    %262 = vrot.lane.b32.xlu0 %v168, 127
    %v263 = vpop.permute.xlu0 %262
    %264 = vrot.lane.b32.xlu0 %v172, 127
    %v265 = vpop.permute.xlu0 %264
    %266 = vrot.lane.b32.xlu0 %v169, 127
    %v267 = vpop.permute.xlu0 %266
    %268 = vrot.lane.b32.xlu0 %v174, 127
    %v269 = vpop.permute.xlu0 %268
    %vm270 = vcmask 1039360
    %v271 = vsel %vm270, %v263, %v265
    %v272 = vsel %vm270, %v265, %v267
    %v273 = vsel %vm270, %v267, %v269
    %277 = vst [vmem:[#allocation2] sm:$0xf] %v271
    %278 = vst [vmem:[#allocation2 + $0x8] sm:$0xf] %v272
    %279 = vst [vmem:[#allocation2 + $0x10] sm:$0xf] %v273
    %280 = vrot.lane.b32.xlu0 %v168, 109
    %v281 = vpop.permute.xlu0 %280
    %282 = vrot.lane.b32.xlu0 %v172, 109
    %v283 = vpop.permute.xlu0 %282
    %284 = vrot.lane.b32.xlu0 %v169, 109
    %v285 = vpop.permute.xlu0 %284
    %286 = vrot.lane.b32.xlu0 %v174, 109
    %v287 = vpop.permute.xlu0 %286
    %vm288 = vcmask 891904
    %v289 = vsel %vm288, %v281, %v283
    %v290 = vsel %vm288, %v283, %v285
    %v291 = vsel %vm288, %v285, %v287
    %295 = vst [vmem:[#allocation2 + $0x30] sm:$0xf] %v289
    %296 = vst [vmem:[#allocation2 + $0x38] sm:$0xf] %v290
    %297 = vst [vmem:[#allocation2 + $0x40] sm:$0xf] %v291
    %298 = vrot.lane.b32.xlu0 %v168, 91
    %v299 = vpop.permute.xlu0 %298
    %300 = vrot.lane.b32.xlu0 %v172, 91
    %v301 = vpop.permute.xlu0 %300
    %302 = vrot.lane.b32.xlu0 %v169, 91
    %v303 = vpop.permute.xlu0 %302
    %304 = vrot.lane.b32.xlu0 %v174, 91
    %v305 = vpop.permute.xlu0 %304
    %vm306 = vcmask 744448
    %v307 = vsel %vm306, %v299, %v301
    %v308 = vsel %vm306, %v301, %v303
    %v309 = vsel %vm306, %v303, %v305
    %313 = vst [vmem:[#allocation2 + $0x60] sm:$0xf] %v307
    %314 = vst [vmem:[#allocation2 + $0x68] sm:$0xf] %v308
    %315 = vst [vmem:[#allocation2 + $0x70] sm:$0xf] %v309
    %316 = vst [vmem:[#allocation2 + $0x90] sm:$0xf] %v190
    %317 = vst [vmem:[#allocation2 + $0x98] sm:$0xf] %v191
    %318 = vst [vmem:[#allocation2 + $0xa0] sm:$0xf] %v192
    %319 = vst [vmem:[#allocation2 + $0xc0] sm:$0xf] %v208
    %320 = vst [vmem:[#allocation2 + $0xc8] sm:$0xf] %v209
    %321 = vst [vmem:[#allocation2 + $0xd0] sm:$0xf] %v210
    %322 = vst [vmem:[#allocation2 + $0xf0] sm:$0xf] %v241
    %323 = vst [vmem:[#allocation2 + $0xf8] sm:$0xf] %v242
    %324 = vst [vmem:[#allocation2 + $0x100] sm:$0xf] %v243
    %325 = vst [vmem:[#allocation2 + $0x120] sm:$0xf] %v259
    %326 = vst [vmem:[#allocation2 + $0x128] sm:$0xf] %v260
    %327 = vst [vmem:[#allocation2 + $0x130] sm:$0xf] %v261
    %s328 = scalar_lea.vmem [#allocation3], 16
    %v329 = vld [vmem:[%s328] sm:$0xff]
    %v330 = vld [vmem:[%s328 + $0x8] sm:$0xff]
    %v333 = vcombine.high %v329, %v329
    %v335 = vcombine.high %v330, %v330
    %336 = vrot.lane.b32.xlu0 %v329, 110
    %v337 = vpop.permute.xlu0 %336
    %338 = vrot.lane.b32.xlu0 %v333, 110
    %v339 = vpop.permute.xlu0 %338
    %340 = vrot.lane.b32.xlu0 %v330, 110
    %v341 = vpop.permute.xlu0 %340
    %342 = vrot.lane.b32.xlu0 %v335, 110
    %v343 = vpop.permute.xlu0 %342
    %v344 = vsel %vm183, %v337, %v339
    %v345 = vsel %vm183, %v339, %v341
    %v346 = vsel %vm183, %v341, %v343
    %v350 = vsel %vm165, %v329, %v344
    %v351 = vsel %vm166, %v333, %v345
    %v352 = vsel %vm167, %v330, %v346
    %353 = vrot.lane.b32.xlu0 %v329, 92
    %v354 = vpop.permute.xlu0 %353
    %355 = vrot.lane.b32.xlu0 %v333, 92
    %v356 = vpop.permute.xlu0 %355
    %357 = vrot.lane.b32.xlu0 %v330, 92
    %v358 = vpop.permute.xlu0 %357
    %359 = vrot.lane.b32.xlu0 %v335, 92
    %v360 = vpop.permute.xlu0 %359
    %v361 = vsel %vm201, %v354, %v356
    %v362 = vsel %vm201, %v356, %v358
    %v363 = vsel %vm201, %v358, %v360
    %v367 = vsel %vm165, %v344, %v361
    %v368 = vsel %vm166, %v345, %v362
    %v369 = vsel %vm167, %v346, %v363
    %370 = vrot.lane.b32.xlu0 %v329, 126
    %v371 = vpop.permute.xlu0 %370
    %372 = vrot.lane.b32.xlu0 %v333, 126
    %v373 = vpop.permute.xlu0 %372
    %374 = vrot.lane.b32.xlu0 %v330, 126
    %v375 = vpop.permute.xlu0 %374
    %376 = vrot.lane.b32.xlu0 %v335, 126
    %v377 = vpop.permute.xlu0 %376
    %v378 = vsel %vm219, %v371, %v373
    %v379 = vsel %vm219, %v373, %v375
    %v380 = vsel %vm219, %v375, %v377
    %384 = vrot.lane.b32.xlu0 %v329, 108
    %v385 = vpop.permute.xlu0 %384
    %386 = vrot.lane.b32.xlu0 %v333, 108
    %v387 = vpop.permute.xlu0 %386
    %388 = vrot.lane.b32.xlu0 %v330, 108
    %v389 = vpop.permute.xlu0 %388
    %390 = vrot.lane.b32.xlu0 %v335, 108
    %v391 = vpop.permute.xlu0 %390
    %v392 = vsel %vm234, %v385, %v387
    %v393 = vsel %vm234, %v387, %v389
    %v394 = vsel %vm234, %v389, %v391
    %v398 = vsel %vm165, %v378, %v392
    %v399 = vsel %vm166, %v379, %v393
    %v400 = vsel %vm167, %v380, %v394
    %401 = vrot.lane.b32.xlu0 %v329, 90
    %v402 = vpop.permute.xlu0 %401
    %403 = vrot.lane.b32.xlu0 %v333, 90
    %v404 = vpop.permute.xlu0 %403
    %405 = vrot.lane.b32.xlu0 %v330, 90
    %v406 = vpop.permute.xlu0 %405
    %407 = vrot.lane.b32.xlu0 %v335, 90
    %v408 = vpop.permute.xlu0 %407
    %v409 = vsel %vm252, %v402, %v404
    %v410 = vsel %vm252, %v404, %v406
    %v411 = vsel %vm252, %v406, %v408
    %v415 = vsel %vm165, %v392, %v409
    %v416 = vsel %vm166, %v393, %v410
    %v417 = vsel %vm167, %v394, %v411
    %418 = vrot.lane.b32.xlu0 %v329, 127
    %v419 = vpop.permute.xlu0 %418
    %420 = vrot.lane.b32.xlu0 %v333, 127
    %v421 = vpop.permute.xlu0 %420
    %422 = vrot.lane.b32.xlu0 %v330, 127
    %v423 = vpop.permute.xlu0 %422
    %424 = vrot.lane.b32.xlu0 %v335, 127
    %v425 = vpop.permute.xlu0 %424
    %v426 = vsel %vm270, %v419, %v421
    %v427 = vsel %vm270, %v421, %v423
    %v428 = vsel %vm270, %v423, %v425
    %432 = vst [vmem:[#allocation2 + $0x18] sm:$0xf] %v426
    %433 = vst [vmem:[#allocation2 + $0x20] sm:$0xf] %v427
    %434 = vst [vmem:[#allocation2 + $0x28] sm:$0xf] %v428
    %435 = vrot.lane.b32.xlu0 %v329, 109
    %v436 = vpop.permute.xlu0 %435
    %437 = vrot.lane.b32.xlu0 %v333, 109
    %v438 = vpop.permute.xlu0 %437
    %439 = vrot.lane.b32.xlu0 %v330, 109
    %v440 = vpop.permute.xlu0 %439
    %441 = vrot.lane.b32.xlu0 %v335, 109
    %v442 = vpop.permute.xlu0 %441
    %v443 = vsel %vm288, %v436, %v438
    %v444 = vsel %vm288, %v438, %v440
    %v445 = vsel %vm288, %v440, %v442
    %449 = vst [vmem:[#allocation2 + $0x48] sm:$0xf] %v443
    %450 = vst [vmem:[#allocation2 + $0x50] sm:$0xf] %v444
    %451 = vst [vmem:[#allocation2 + $0x58] sm:$0xf] %v445
    %452 = vrot.lane.b32.xlu0 %v329, 91
    %v453 = vpop.permute.xlu0 %452
    %454 = vrot.lane.b32.xlu0 %v333, 91
    %v455 = vpop.permute.xlu0 %454
    %456 = vrot.lane.b32.xlu0 %v330, 91
    %v457 = vpop.permute.xlu0 %456
    %458 = vrot.lane.b32.xlu0 %v335, 91
    %v459 = vpop.permute.xlu0 %458
    %v460 = vsel %vm306, %v453, %v455
    %v461 = vsel %vm306, %v455, %v457
    %v462 = vsel %vm306, %v457, %v459
    %466 = vst [vmem:[#allocation2 + $0x78] sm:$0xf] %v460
    %467 = vst [vmem:[#allocation2 + $0x80] sm:$0xf] %v461
    %468 = vst [vmem:[#allocation2 + $0x88] sm:$0xf] %v462
    %469 = vst [vmem:[#allocation2 + $0xa8] sm:$0xf] %v350
    %470 = vst [vmem:[#allocation2 + $0xb0] sm:$0xf] %v351
    %471 = vst [vmem:[#allocation2 + $0xb8] sm:$0xf] %v352
    %472 = vst [vmem:[#allocation2 + $0xd8] sm:$0xf] %v367
    %473 = vst [vmem:[#allocation2 + $0xe0] sm:$0xf] %v368
    %474 = vst [vmem:[#allocation2 + $0xe8] sm:$0xf] %v369
    %475 = vst [vmem:[#allocation2 + $0x108] sm:$0xf] %v398
    %476 = vst [vmem:[#allocation2 + $0x110] sm:$0xf] %v399
    %477 = vst [vmem:[#allocation2 + $0x118] sm:$0xf] %v400
    %478 = vst [vmem:[#allocation2 + $0x138] sm:$0xf] %v415
    %479 = vst [vmem:[#allocation2 + $0x140] sm:$0xf] %v416
    %480 = vst [vmem:[#allocation2 + $0x148] sm:$0xf] %v417
    %v481 = vld [vmem:[%s1] sm:$0xf]
    %v482 = vld [vmem:[#allocation2] sm:$0xff]
    %v483 = vld [vmem:[#allocation2 + $0x8] sm:$0xff]
    %v484 = vld [vmem:[#allocation2 + $0x10] sm:$0xff]
    %v485 = vld [vmem:[#allocation2 + $0x18] sm:$0xff]
    %v486 = vld [vmem:[#allocation2 + $0x20] sm:$0xff]
    %v487 = vld [vmem:[#allocation2 + $0x28] sm:$0xff]
    %v488 = vld [vmem:[#allocation2 + $0x30] sm:$0xff]
    %v489 = vld [vmem:[#allocation2 + $0x38] sm:$0xff]
    %v490 = vld [vmem:[#allocation2 + $0x40] sm:$0xff]
    %v491 = vld [vmem:[#allocation2 + $0x48] sm:$0xff]
    %v492 = vld [vmem:[#allocation2 + $0x50] sm:$0xff]
    %v493 = vld [vmem:[#allocation2 + $0x58] sm:$0xff]
    %v494 = vld [vmem:[#allocation2 + $0x60] sm:$0xff]
    %v495 = vld [vmem:[#allocation2 + $0x68] sm:$0xff]
    %v496 = vld [vmem:[#allocation2 + $0x70] sm:$0xff]
    %v497 = vld [vmem:[#allocation2 + $0x78] sm:$0xff]
    %v498 = vld [vmem:[#allocation2 + $0x80] sm:$0xff]
    %v499 = vld [vmem:[#allocation2 + $0x88] sm:$0xff]
    %v500 = vld [vmem:[#allocation2 + $0x90] sm:$0xff]
    %v501 = vld [vmem:[#allocation2 + $0x98] sm:$0xff]
    %v502 = vld [vmem:[#allocation2 + $0xa0] sm:$0xff]
    %v503 = vld [vmem:[#allocation2 + $0xa8] sm:$0xff]
    %v504 = vld [vmem:[#allocation2 + $0xb0] sm:$0xff]
    %v505 = vld [vmem:[#allocation2 + $0xb8] sm:$0xff]
    %v506 = vld [vmem:[#allocation2 + $0xc0] sm:$0xff]
    %v507 = vld [vmem:[#allocation2 + $0xc8] sm:$0xff]
    %v508 = vld [vmem:[#allocation2 + $0xd0] sm:$0xff]
    %v509 = vld [vmem:[#allocation2 + $0xd8] sm:$0xff]
    %v510 = vld [vmem:[#allocation2 + $0xe0] sm:$0xff]
    %v511 = vld [vmem:[#allocation2 + $0xe8] sm:$0xff]
    %v512 = vld [vmem:[#allocation2 + $0xf0] sm:$0xff]
    %v513 = vld [vmem:[#allocation2 + $0xf8] sm:$0xff]
    %v514 = vld [vmem:[#allocation2 + $0x100] sm:$0xff]
    %v515 = vld [vmem:[#allocation2 + $0x108] sm:$0xff]
    %v516 = vld [vmem:[#allocation2 + $0x110] sm:$0xff]
    %v517 = vld [vmem:[#allocation2 + $0x118] sm:$0xff]
    %v518 = vld [vmem:[#allocation2 + $0x120] sm:$0xff]
    %v519 = vld [vmem:[#allocation2 + $0x128] sm:$0xff]
    %v520 = vld [vmem:[#allocation2 + $0x130] sm:$0xff]
    %v521 = vld [vmem:[#allocation2 + $0x138] sm:$0xff]
    %v522 = vld [vmem:[#allocation2 + $0x140] sm:$0xff]
    %v523 = vld [vmem:[#allocation2 + $0x148] sm:$0xff]
    %v524 = vld [vmem:[%s2] sm:$0xf]
    %526 = vset.pattern.permute.xlu0 0
    %527 = vperm.xlu0 %526, %v524
    %v528 = vpop.permute.xlu0 %527
    %vm530 = vcmask 457728
    %v532 = vsel %vm530, %v481, 0
    %534 = vmatprep.subr.mxu0 %v483
    %535 = vmatpush1.msra.mxu0 %v482
    %536 = vmatprep.subr.mxu0 %v489
    %537 = vmatpush1.msra.mxu0 %v488
    %538 = vmatprep.subr.mxu0 %v495
    %539 = vmatpush1.msra.mxu0 %v494
    %540 = vmatprep.subr.mxu0 %v501
    %541 = vmatpush1.msra.mxu0 %v500
    %542 = vmatprep.subr.mxu0 %v507
    %543 = vmatpush1.msra.mxu0 %v506
    %544 = vmatprep.subr.mxu0 %v513
    %545 = vmatpush1.msra.mxu0 %v512
    %546 = vmatprep.subr.mxu0 %v519
    %547 = vmatpush1.msra.mxu0 %v518
    %548 = vmatprep.subr.mxu0 0.0
    %549 = vmatpush1.msra.mxu0 0.0
    %550 = vmatprep.subr.mxu0 0.0
    %551 = vmatpush1.msra.mxu0 0.0
    %552 = vmatprep.subr.mxu0 0.0
    %553 = vmatpush1.msra.mxu0 0.0
    %554 = vmatprep.subr.mxu0 0.0
    %555 = vmatpush1.msra.mxu0 0.0
    %556 = vmatprep.subr.mxu0 0.0
    %557 = vmatpush1.msra.mxu0 0.0
    %558 = vmatprep.subr.mxu0 0.0
    %559 = vmatpush1.msra.mxu0 0.0
    %560 = vmatprep.subr.mxu0 0.0
    %561 = vmatpush1.msra.mxu0 0.0
    %562 = vmatprep.subr.mxu0 0.0
    %563 = vmatpush1.msra.mxu0 0.0
    %564 = vmatprep.subr.mxu0 0.0
    %565 = vmatpush1.msra.mxu0 0.0
    %566 = vmatprep.subr.mxu0 0.0
    %567 = vmatpush1.msra.mxu0 0.0
    %568 = vmatprep.subr.mxu0 0.0
    %569 = vmatpush1.msra.mxu0 0.0
    %570 = vmatprep.subr.mxu0 0.0
    %571 = vmatpush1.msra.mxu0 0.0
    %572 = vmatprep.subr.mxu0 0.0
    %573 = vmatpush1.msra.mxu0 0.0
    %574 = vmatprep.subr.mxu0 0.0
    %575 = vmatpush1.msra.mxu0 0.0
    %576 = vmatprep.subr.mxu0 0.0
    %577 = vmatpush1.msra.mxu0 0.0
    %578 = vmatprep.subr.mxu0 0.0
    %579 = vmatpush1.msra.mxu0 0.0
    %580 = vmatprep.subr.mxu0 0.0
    %581 = vmatpush1.msra.mxu0 0.0
    %582 = vmatprep.subr.mxu0 0.0
    %583 = vmatpush1.msra.mxu0 0.0
    %584 = vmatprep.subr.mxu0 0.0
    %585 = vmatpush1.msra.mxu0 0.0
    %586 = vmatprep.subr.mxu0 0.0
    %587 = vmatpush1.msra.mxu0 0.0
    %588 = vmatprep.subr.mxu0 0.0
    %589 = vmatpush1.msra.mxu0 0.0
    %590 = vmatprep.subr.mxu0 0.0
    %591 = vmatpush1.msra.mxu0 0.0
    %592 = vmatprep.subr.mxu0 0.0
    %593 = vmatpush1.msra.mxu0 0.0
    %594 = vmatprep.subr.mxu0 0.0
    %595 = vmatpush1.msra.mxu0 0.0
    %596 = vmatprep.subr.mxu0 0.0
    %597 = vmatpush1.msra.mxu0 0.0
    %598 = vmatprep.mubr.f32.mxu0 0.0
    %599 = vmatmul.mubr.f32.gmra.mrb[0].mxu0 %v532
    %v600 = vpop.f32.mrb[0].mxu0
    %v601 = vadd.f32 %v528, %v600
    %v602 = vpop.f32.mrb[0].mxu0
    %v603 = vadd.f32 %v528, %v602
    %604 = vdwg.mxu0
    %605 = vmatprep.subr.mxu0 %v485
    %606 = vmatpush1.msra.mxu0 %v484
    %607 = vmatprep.subr.mxu0 %v491
    %608 = vmatpush1.msra.mxu0 %v490
    %609 = vmatprep.subr.mxu0 %v497
    %610 = vmatpush1.msra.mxu0 %v496
    %611 = vmatprep.subr.mxu0 %v503
    %612 = vmatpush1.msra.mxu0 %v502
    %613 = vmatprep.subr.mxu0 %v509
    %614 = vmatpush1.msra.mxu0 %v508
    %615 = vmatprep.subr.mxu0 %v515
    %616 = vmatpush1.msra.mxu0 %v514
    %617 = vmatprep.subr.mxu0 %v521
    %618 = vmatpush1.msra.mxu0 %v520
    %619 = vmatprep.subr.mxu0 0.0
    %620 = vmatpush1.msra.mxu0 0.0
    %621 = vmatprep.subr.mxu0 0.0
    %622 = vmatpush1.msra.mxu0 0.0
    %623 = vmatprep.subr.mxu0 0.0
    %624 = vmatpush1.msra.mxu0 0.0
    %625 = vmatprep.subr.mxu0 0.0
    %626 = vmatpush1.msra.mxu0 0.0
    %627 = vmatprep.subr.mxu0 0.0
    %628 = vmatpush1.msra.mxu0 0.0
    %629 = vmatprep.subr.mxu0 0.0
    %630 = vmatpush1.msra.mxu0 0.0
    %631 = vmatprep.subr.mxu0 0.0
    %632 = vmatpush1.msra.mxu0 0.0
    %633 = vmatprep.subr.mxu0 0.0
    %634 = vmatpush1.msra.mxu0 0.0
    %635 = vmatprep.subr.mxu0 0.0
    %636 = vmatpush1.msra.mxu0 0.0
    %637 = vmatprep.subr.mxu0 0.0
    %638 = vmatpush1.msra.mxu0 0.0
    %639 = vmatprep.subr.mxu0 0.0
    %640 = vmatpush1.msra.mxu0 0.0
    %641 = vmatprep.subr.mxu0 0.0
    %642 = vmatpush1.msra.mxu0 0.0
    %643 = vmatprep.subr.mxu0 0.0
    %644 = vmatpush1.msra.mxu0 0.0
    %645 = vmatprep.subr.mxu0 0.0
    %646 = vmatpush1.msra.mxu0 0.0
    %647 = vmatprep.subr.mxu0 0.0
    %648 = vmatpush1.msra.mxu0 0.0
    %649 = vmatprep.subr.mxu0 0.0
    %650 = vmatpush1.msra.mxu0 0.0
    %651 = vmatprep.subr.mxu0 0.0
    %652 = vmatpush1.msra.mxu0 0.0
    %653 = vmatprep.subr.mxu0 0.0
    %654 = vmatpush1.msra.mxu0 0.0
    %655 = vmatprep.subr.mxu0 0.0
    %656 = vmatpush1.msra.mxu0 0.0
    %657 = vmatprep.subr.mxu0 0.0
    %658 = vmatpush1.msra.mxu0 0.0
    %659 = vmatprep.subr.mxu0 0.0
    %660 = vmatpush1.msra.mxu0 0.0
    %661 = vmatprep.subr.mxu0 0.0
    %662 = vmatpush1.msra.mxu0 0.0
    %663 = vmatprep.subr.mxu0 0.0
    %664 = vmatpush1.msra.mxu0 0.0
    %665 = vmatprep.subr.mxu0 0.0
    %666 = vmatpush1.msra.mxu0 0.0
    %667 = vmatprep.subr.mxu0 0.0
    %668 = vmatpush1.msra.mxu0 0.0
    %669 = vmatprep.mubr.f32.mxu0 0.0
    %670 = vmatmul.mubr.f32.gmra.mrb[0].mxu0 %v532
    %v671 = vpop.f32.mrb[0].mxu0
    %v672 = vadd.f32 %v528, %v671
    %v673 = vpop.f32.mrb[0].mxu0
    %v674 = vadd.f32 %v528, %v673
    %675 = vdwg.mxu0
    %676 = vmatprep.subr.mxu0 %v487
    %677 = vmatpush1.msra.mxu0 %v486
    %678 = vmatprep.subr.mxu0 %v493
    %679 = vmatpush1.msra.mxu0 %v492
    %680 = vmatprep.subr.mxu0 %v499
    %681 = vmatpush1.msra.mxu0 %v498
    %682 = vmatprep.subr.mxu0 %v505
    %683 = vmatpush1.msra.mxu0 %v504
    %684 = vmatprep.subr.mxu0 %v511
    %685 = vmatpush1.msra.mxu0 %v510
    %686 = vmatprep.subr.mxu0 %v517
    %687 = vmatpush1.msra.mxu0 %v516
    %688 = vmatprep.subr.mxu0 %v523
    %689 = vmatpush1.msra.mxu0 %v522
    %690 = vmatprep.subr.mxu0 0.0
    %691 = vmatpush1.msra.mxu0 0.0
    %692 = vmatprep.subr.mxu0 0.0
    %693 = vmatpush1.msra.mxu0 0.0
    %694 = vmatprep.subr.mxu0 0.0
    %695 = vmatpush1.msra.mxu0 0.0
    %696 = vmatprep.subr.mxu0 0.0
    %697 = vmatpush1.msra.mxu0 0.0
    %698 = vmatprep.subr.mxu0 0.0
    %699 = vmatpush1.msra.mxu0 0.0
    %700 = vmatprep.subr.mxu0 0.0
    %701 = vmatpush1.msra.mxu0 0.0
    %702 = vmatprep.subr.mxu0 0.0
    %703 = vmatpush1.msra.mxu0 0.0
    %704 = vmatprep.subr.mxu0 0.0
    %705 = vmatpush1.msra.mxu0 0.0
    %706 = vmatprep.subr.mxu0 0.0
    %707 = vmatpush1.msra.mxu0 0.0
    %708 = vmatprep.subr.mxu0 0.0
    %709 = vmatpush1.msra.mxu0 0.0
    %710 = vmatprep.subr.mxu0 0.0
    %711 = vmatpush1.msra.mxu0 0.0
    %712 = vmatprep.subr.mxu0 0.0
    %713 = vmatpush1.msra.mxu0 0.0
    %714 = vmatprep.subr.mxu0 0.0
    %715 = vmatpush1.msra.mxu0 0.0
    %716 = vmatprep.subr.mxu0 0.0
    %717 = vmatpush1.msra.mxu0 0.0
    %718 = vmatprep.subr.mxu0 0.0
    %719 = vmatpush1.msra.mxu0 0.0
    %720 = vmatprep.subr.mxu0 0.0
    %721 = vmatpush1.msra.mxu0 0.0
    %722 = vmatprep.subr.mxu0 0.0
    %723 = vmatpush1.msra.mxu0 0.0
    %724 = vmatprep.subr.mxu0 0.0
    %725 = vmatpush1.msra.mxu0 0.0
    %726 = vmatprep.subr.mxu0 0.0
    %727 = vmatpush1.msra.mxu0 0.0
    %728 = vmatprep.subr.mxu0 0.0
    %729 = vmatpush1.msra.mxu0 0.0
    %730 = vmatprep.subr.mxu0 0.0
    %731 = vmatpush1.msra.mxu0 0.0
    %732 = vmatprep.subr.mxu0 0.0
    %733 = vmatpush1.msra.mxu0 0.0
    %734 = vmatprep.subr.mxu0 0.0
    %735 = vmatpush1.msra.mxu0 0.0
    %736 = vmatprep.subr.mxu0 0.0
    %737 = vmatpush1.msra.mxu0 0.0
    %738 = vmatprep.subr.mxu0 0.0
    %739 = vmatpush1.msra.mxu0 0.0
    %740 = vmatprep.mubr.f32.mxu0 0.0
    %741 = vmatmul.mubr.f32.gmra.mrb[0].mxu0 %v532
    %v742 = vpop.f32.mrb[0].mxu0
    %v743 = vadd.f32 %v528, %v742
    %v744 = vpop.f32.mrb[0].mxu0
    %v745 = vadd.f32 %v528, %v744
    %746 = vdwg.mxu0
    %v747 = vmax.f32 %v601, 0.0
    %v748 = vmax.f32 %v603, 0.0
    %v749 = vmax.f32 %v672, 0.0
    %v750 = vmax.f32 %v674, 0.0
    %v751 = vmax.f32 %v743, 0.0
    %v752 = vmax.f32 %v745, 0.0
    %v755 = vcombine.low %v747, %v748
    %757 = vst [vmem:[#allocation6] sm:$0xff] %v755
    %758 = vst [vmem:[#allocation6 + $0x8] sm:$0xf] %v749
    %v761 = vcombine.low %v750, %v751
    %s763 = scalar_lea.vmem [#allocation6], 12
    %764 = vst [vmem:[%s763] sm:$0xff] %v761
    %765 = vst [vmem:[%s763 + $0x8] sm:$0xf] %v752
    // Predicated region
    $region18: #{tpu_custom_call.1} parent=1 // pred_check
      _
    $region19: #{tpu_custom_call.1} parent=1 // pred_check_branch
      %767 = sbr.rel (0) target = $region21
    $region20: #{tpu_custom_call.1} parent=1 // pred_region
      %s769 = ssub.s32 384, 384
      %770 = vsyncadd [#allocation5], %s769
      %s771 = sshll.u32 [#allocation6], 4
      %s772 = int_to_ptr.vmem [resolvable:$true] %s771
      %777 = dma.vmem_to_hbm [thread:$0]  %s772, 384, %s3, [#allocation5], 192, 192, 12
    $region21: #{tpu_custom_call.1} parent=1 // pred_fallthru
      _
    // Predicated region
    $region22: #{tpu_custom_call.1} parent=1 // pred_check
      _
    $region23: #{tpu_custom_call.1} parent=1 // pred_check_branch
      %779 = sbr.rel (0) target = $region25
    $region24: #{tpu_custom_call.1} parent=1 // pred_region
      %780 = dma.done [#allocation5], 384
    $region25: #{tpu_custom_call.1} parent=1 // pred_fallthru
      _
    %781 = vsyncpa [#allocation4], 1
    %782 = vsyncpa [#allocation5], 1

</llo_original>
